<compile_context>
chip_gen: v5e
topology: v5e:2x2
jax: 0.10.0
libtpu: 0.0.40
codegen_flags: <defaults>
</compile_context>

<pallas_src>
import jax
import jax.numpy as jnp
from jax.experimental import pallas as pl
from jax.experimental.pallas import tpu as pltpu

_LANE = 128
_SUBLANE = 8
_TARGET_STEP_BYTES = 8 * 1024 * 1024   # input DMA volume per grid step (~8 MiB)
_VMEM_FLOOR = 16 * 1024 * 1024         # v5e default scoped VMEM is only 16 MiB
_VMEM_CAP = 48 * 1024 * 1024           # stay well under v7x 64 MiB physical VMEM
_NUM_CORES = 2                         # keep >=2 grid steps for v7x megacore


def _round_up(x, m):
    return ((x + m - 1) // m) * m


def _partial_loss_kernel(x_ref, conf_ref, loss_ref):
    # x_ref, conf_ref: (tile_b, C) VMEM blocks.  loss_ref: (1, 1, tile_b).
    x = x_ref[...].astype(jnp.float32)
    conf = conf_ref[...].astype(jnp.float32)

    m = jnp.max(x, axis=1, keepdims=True)                           # (tile_b, 1)
    lse = jnp.log(jnp.sum(jnp.exp(x - m), axis=1, keepdims=True))   # (tile_b, 1)

    # loss = -sum(log_softmax(x) * conf) = sum((m + lse - x) * conf)
    # Elementwise form keeps per-element cancellation (better numerics than the
    # fully folded form); the extra VPU subtract is free under the HBM roofline.
    loss = jnp.sum((m + lse - x) * conf, axis=1, keepdims=True)     # (tile_b, 1)

    # Lane-dense store: batch index on the lane axis.
    loss_ref[...] = loss.T.reshape(1, 1, loss.shape[0])


def _pick_tile_b(batch, bytes_per_row):
    if batch <= _SUBLANE:
        return batch                                 # full-extent batch block
    # ~8 MiB of input bytes per grid step amortizes per-step pipeline overhead.
    tile = max(_SUBLANE, _TARGET_STEP_BYTES // max(bytes_per_row, 1))
    # Ensure >=2 grid steps so both v7x TensorCores get work (no-op on v5e/v6e).
    per_core = _round_up(-(-batch // _NUM_CORES), _SUBLANE)
    tile = min(tile, per_core, _round_up(batch, _SUBLANE))
    return max(_SUBLANE, (tile // _SUBLANE) * _SUBLANE)


def partial_loss_forward(outputs, confidence_rows, *, tile_b=None):
    """outputs: [B, C] logits.  confidence_rows: [B, C] weight rows
    (= confidence[index, :] or, for the `targets is not None` branch, targets).

    Returns (average_loss, loss_vec) like the PyTorch module's forward.
    """
    B, C = outputs.shape
    assert confidence_rows.shape == (B, C)

    it_x = jnp.dtype(outputs.dtype).itemsize
    it_c = jnp.dtype(confidence_rows.dtype).itemsize
    bytes_per_row = C * (it_x + it_c)

    if tile_b is None:
        tile_b = _pick_tile_b(B, bytes_per_row)
    elif B <= _SUBLANE:
        tile_b = B
    else:
        tile_b = min(_round_up(max(tile_b, 1), _SUBLANE), _round_up(B, _SUBLANE))
    num_tiles = pl.cdiv(B, tile_b)

    # Actual double-buffered VMEM requirement (layout-padded block dims), x2
    # slack, floored/capped for generation safety.
    c_lanes = _round_up(C, _LANE)
    b_sub = _round_up(tile_b, _SUBLANE)
    block_in_bytes = b_sub * c_lanes * (it_x + it_c)
    block_out_bytes = _SUBLANE * _round_up(tile_b, _LANE) * 4
    needed = 2 * (block_in_bytes + block_out_bytes)
    vmem_limit = int(min(max(2 * needed, _VMEM_FLOOR), _VMEM_CAP))

    cost = pl.CostEstimate(
        flops=6 * B * C,
        transcendentals=B * C + B,
        bytes_accessed=B * C * (it_x + it_c) + B * 4,
    )

    loss_tiles = pl.pallas_call(
        _partial_loss_kernel,
        out_shape=jax.ShapeDtypeStruct((num_tiles, 1, tile_b), jnp.float32),
        grid=(num_tiles,),
        in_specs=[
            pl.BlockSpec((tile_b, C), lambda i: (i, 0)),
            pl.BlockSpec((tile_b, C), lambda i: (i, 0)),
        ],
        out_specs=pl.BlockSpec((1, 1, tile_b), lambda i: (i, 0, 0)),
        compiler_params=pltpu.CompilerParams(
            dimension_semantics=("parallel",),
            vmem_limit_bytes=vmem_limit,
        ),
        cost_estimate=cost,
    )(outputs, confidence_rows)

    # Garbage rows of a partial last block are discarded here.
    loss_vec = loss_tiles.reshape(num_tiles * tile_b)[:B]
    # Tiny O(B) reduction in plain JAX so the batch grid axis stays parallel.
    average_loss = jnp.mean(loss_vec)
    return average_loss, loss_vec


def make_confidence(train_givenY, dtype=jnp.float32):
    """Replicates the module __init__ (row-normalized candidate mask).

    Pass dtype=jnp.bfloat16 to halve HBM traffic of this memory-bound loss.
    """
    temp_y = jnp.sum(train_givenY, axis=1, keepdims=True)
    return (train_givenY.astype(jnp.float32) / temp_y).astype(dtype)


def confidence_update(confidence, temp_un_conf, batch_index):
    """Functional equivalent of the @torch.no_grad confidence_update."""
    return confidence.at[batch_index, :].set(temp_un_conf.astype(confidence.dtype))


def _reference(outputs, conf_rows):
    x = outputs.astype(jnp.float32)
    c = conf_rows.astype(jnp.float32)
    lv = -jnp.sum(jax.nn.log_softmax(x, axis=1) * c, axis=1)
    return jnp.mean(lv), lv


if __name__ == "__main__":
    key = jax.random.PRNGKey(0)
    k1, k2, k3, k4, k5 = jax.random.split(key, 5)

    # ---- Test 1: f32, aligned batch, gather of confidence[index, :] ---------
    N, B, C = 32, 8, 16
    given = (jax.random.uniform(k1, (N, C)) < 0.3).astype(jnp.float32)
    given = given.at[jnp.arange(N), jnp.arange(N) % C].set(1.0)
    confidence = make_confidence(given)                       # [N, C] f32

    outputs = jax.random.normal(k2, (B, C), dtype=jnp.float32)
    index = jax.random.permutation(k3, N)[:B]
    conf_rows = jnp.take(confidence, index, axis=0)           # confidence[index, :]

    avg_loss, loss_vec = partial_loss_forward(outputs, conf_rows)
    jax.block_until_ready((avg_loss, loss_vec))
    ref_avg, ref_vec = _reference(outputs, conf_rows)
    assert jnp.allclose(loss_vec, ref_vec, atol=1e-5, rtol=1e-5)
    assert jnp.allclose(avg_loss, ref_avg, atol=1e-5, rtol=1e-5)

    # ---- Test 2: bf16 streams, C not a multiple of 128, partial last block --
    B2, C2 = 22, 20
    given2 = (jax.random.uniform(k4, (N, C2)) < 0.3).astype(jnp.float32)
    given2 = given2.at[jnp.arange(N), jnp.arange(N) % C2].set(1.0)
    confidence_bf16 = make_confidence(given2, dtype=jnp.bfloat16)
    outputs2 = jax.random.normal(k5, (B2, C2), dtype=jnp.float32).astype(jnp.bfloat16)
    conf_rows2 = jnp.take(confidence_bf16, jnp.arange(B2) % N, axis=0)

    avg2, lv2 = partial_loss_forward(outputs2, conf_rows2)    # 2 grid steps, tail rows OOB
    jax.block_until_ready((avg2, lv2))
    ref_avg2, ref_vec2 = _reference(outputs2, conf_rows2)
    assert jnp.allclose(lv2, ref_vec2, atol=1e-4, rtol=1e-4)
    assert jnp.allclose(avg2, ref_avg2, atol=1e-4, rtol=1e-4)

    # ---- Test 3: explicit small tile -> multi-step grid with partial tail ---
    B3, C3 = 20, 12
    outputs3 = jax.random.normal(jax.random.PRNGKey(1), (B3, C3), dtype=jnp.float32)
    targets3 = jax.nn.softmax(jax.random.normal(jax.random.PRNGKey(2), (B3, C3)), axis=1)
    avg3, lv3 = partial_loss_forward(outputs3, targets3, tile_b=8)   # `targets` branch
    jax.block_until_ready((avg3, lv3))
    ref_avg3, ref_vec3 = _reference(outputs3, targets3)
    assert jnp.allclose(lv3, ref_vec3, atol=1e-5, rtol=1e-5)
    assert jnp.allclose(avg3, ref_avg3, atol=1e-5, rtol=1e-5)

    # Exercise the functional confidence_update helper once.
    confidence = confidence_update(confidence, jax.nn.softmax(outputs, axis=1), index)
    jax.block_until_ready(confidence)

    print("KERNEL_OK")
</pallas_src>

<mosaic_0001>
module attributes {stable_mosaic.version = 11 : i64} {
  func.func @_partial_loss_kernel(%arg0: i32, %arg1: memref<8x16xf32, #tpu.memory_space<vmem>>, %arg2: memref<8x16xf32, #tpu.memory_space<vmem>>, %arg3: memref<1x1x8xf32, #tpu.memory_space<vmem>>) attributes {dimension_semantics = [#tpu.dimension_semantics<parallel>], iteration_bounds = array<i64: 1>, scalar_prefetch = 0 : i64, scratch_operands = 0 : i64, tpu.core_type = #tpu.core_type<tc>, window_params = [{transform_indices = @transform_0, window_bounds = array<i64: 8, 16>}, {transform_indices = @transform_1, window_bounds = array<i64: 8, 16>}, {transform_indices = @transform_2, window_bounds = array<i64: 1, 1, 8>}]} {
    %c0 = arith.constant 0 : index
    %c0_0 = arith.constant 0 : index
    %0 = vector.load %arg1[%c0, %c0_0] : memref<8x16xf32, #tpu.memory_space<vmem>>, vector<8x16xf32>
    %c0_1 = arith.constant 0 : index
    %c0_2 = arith.constant 0 : index
    %1 = vector.load %arg2[%c0_1, %c0_2] : memref<8x16xf32, #tpu.memory_space<vmem>>, vector<8x16xf32>
    %cst = arith.constant dense<0xFF800000> : vector<8xf32>
    %2 = vector.multi_reduction <maximumf>, %0, %cst [1] : vector<8x16xf32> to vector<8xf32>
    %3 = vector.shape_cast %2 : vector<8xf32> to vector<8x1xf32>
    %4 = vector.broadcast %3 : vector<8x1xf32> to vector<8x16xf32>
    %5 = arith.subf %0, %4 : vector<8x16xf32>
    %6 = math.exp %5 : vector<8x16xf32>
    %cst_3 = arith.constant dense<0.000000e+00> : vector<8xf32>
    %7 = vector.multi_reduction <add>, %6, %cst_3 [1] : vector<8x16xf32> to vector<8xf32>
    %8 = vector.shape_cast %7 : vector<8xf32> to vector<8x1xf32>
    %9 = math.log %8 : vector<8x1xf32>
    %10 = arith.addf %3, %9 : vector<8x1xf32>
    %11 = vector.broadcast %10 : vector<8x1xf32> to vector<8x16xf32>
    %12 = arith.subf %11, %0 : vector<8x16xf32>
    %13 = arith.mulf %12, %1 : vector<8x16xf32>
    %cst_4 = arith.constant dense<0.000000e+00> : vector<8xf32>
    %14 = vector.multi_reduction <add>, %13, %cst_4 [1] : vector<8x16xf32> to vector<8xf32>
    %15 = vector.shape_cast %14 : vector<8xf32> to vector<8x1xf32>
    %16 = tpu.transpose %15, [1, 0] : vector<8x1xf32> -> vector<1x8xf32>
    %17 = vector.shape_cast %16 : vector<1x8xf32> to vector<1x1x8xf32>
    %c0_5 = arith.constant 0 : index
    %c0_6 = arith.constant 0 : index
    %c0_7 = arith.constant 0 : index
    %18 = vector.load %arg3[%c0_5, %c0_6, %c0_7] : memref<1x1x8xf32, #tpu.memory_space<vmem>>, vector<1x1x8xf32>
    tpu.vector_store %arg3[%c0_5, %c0_6, %c0_7], %17 {strides = array<i32>} : memref<1x1x8xf32, #tpu.memory_space<vmem>>, vector<1x1x8xf32>,
    return
  }
  func.func @transform_0(%arg0: i32) -> (i32, i32) {
    %c0_i32 = arith.constant 0 : i32
    %c0_i32_0 = arith.constant 0 : i32
    return %arg0, %c0_i32 : i32, i32
  }
  func.func @transform_1(%arg0: i32) -> (i32, i32) {
    %c0_i32 = arith.constant 0 : i32
    %c0_i32_0 = arith.constant 0 : i32
    return %arg0, %c0_i32 : i32, i32
  }
  func.func @transform_2(%arg0: i32) -> (i32, i32, i32) {
    %c0_i32 = arith.constant 0 : i32
    %c0_i32_0 = arith.constant 0 : i32
    %c0_i32_1 = arith.constant 0 : i32
    return %arg0, %c0_i32, %c0_i32_0 : i32, i32, i32
  }
}

</mosaic_0001>

<llo_original>
// kernel: tpu_custom_call.1
$region0: #{tpu_custom_call.1}
  #allocation0 [shape = 'u32[]', space=smem, size = 0x4, offset = 0x4, fixed_abs, tag = 'smem constant byte address 0x4 - core index']
  #allocation1 [shape = 'u32[72,128]{1,0:T(1,128)}', space=vmem, size = 0x9000, scoped, tag = 'internal scratch']
  %s0 = inlined_call_operand.hbm [shape: f32[8,16], index: 0, kind: input, shape index: {}]
  %s1 = inlined_call_operand.hbm [shape: f32[8,16], index: 1, kind: input, shape index: {}]
  %s2 = inlined_call_operand.hbm [shape: f32[1,1,8], index: 2, kind: output, shape index: {}]
  %s3 = sld [smem:[#allocation0]]
  $region26: #{tpu_custom_call.1} parent=0
    _
  %s5 = ssub.s32 1, %s3
  %s6 = scalar_select 0, %s5, %s3
  $region1: #{tpu_custom_call.1} parent=0
    #allocation2 [shape = 'u8[4096]{0}', space=vmem, size = 0x1000, scoped, tag = 'input window, operand 0, single buffered']
    #allocation3 [shape = 's32[1]{0}', space=sflag, size = 0x4, scoped, tag = 'scoped memory for tpu_custom_call.1']
    #allocation4 [shape = 's32[1]{0}', space=sflag, size = 0x4, scoped, tag = 'scoped memory for tpu_custom_call.1']
    #allocation5 [shape = 'u8[4096]{0}', space=vmem, size = 0x1000, scoped, tag = 'input window, operand 1, single buffered']
    #allocation6 [shape = 's32[1]{0}', space=sflag, size = 0x4, scoped, tag = 'scoped memory for tpu_custom_call.1']
    #allocation7 [shape = 'u8[512]{0}', space=vmem, size = 0x400, scoped, tag = 'output window, operand 0, single buffered']
    %7 = vsyncpa [#allocation3], 0
    %8 = vsyncpa [#allocation6], 0
    %9 = vsyncpa [#allocation4], 0
    // Predicated region
    $region2: #{tpu_custom_call.1} parent=1 // pred_check
      _
    $region3: #{tpu_custom_call.1} parent=1 // pred_check_branch
      %11 = sbr.rel (0) target = $region5
    $region4: #{tpu_custom_call.1} parent=1 // pred_region
      %13 = vsyncadd [#allocation3], 0
      %s15 = sshll.u32 %s0, 4
      %s16 = int_to_ptr.hbm [resolvable:$true] %s15
      %s17 = sshll.u32 [#allocation2], 4
      %s18 = int_to_ptr.vmem [resolvable:$true] %s17
      %20 = dma.hbm_to_vmem [thread:$0]  %s16, 128, %s18, [#allocation3]
    $region5: #{tpu_custom_call.1} parent=1 // pred_fallthru
      _
    // Predicated region
    $region6: #{tpu_custom_call.1} parent=1 // pred_check
      _
    $region7: #{tpu_custom_call.1} parent=1 // pred_check_branch
      %22 = sbr.rel (0) target = $region9
    $region8: #{tpu_custom_call.1} parent=1 // pred_region
      %24 = vsyncadd [#allocation6], 0
      %s26 = sshll.u32 %s1, 4
      %s27 = int_to_ptr.hbm [resolvable:$true] %s26
      %s28 = sshll.u32 [#allocation5], 4
      %s29 = int_to_ptr.vmem [resolvable:$true] %s28
      %31 = dma.hbm_to_vmem [thread:$0]  %s27, 128, %s29, [#allocation6]
    $region9: #{tpu_custom_call.1} parent=1 // pred_fallthru
      _
    // Predicated region
    $region10: #{tpu_custom_call.1} parent=1 // pred_check
      _
    $region11: #{tpu_custom_call.1} parent=1 // pred_check_branch
      %33 = sbr.rel (0) target = $region13
    $region12: #{tpu_custom_call.1} parent=1 // pred_region
      %35 = dma.done [#allocation3], 128
    $region13: #{tpu_custom_call.1} parent=1 // pred_fallthru
      _
    // Predicated region
    $region14: #{tpu_custom_call.1} parent=1 // pred_check
      _
    $region15: #{tpu_custom_call.1} parent=1 // pred_check_branch
      %37 = sbr.rel (0) target = $region17
    $region16: #{tpu_custom_call.1} parent=1 // pred_region
      %39 = dma.done [#allocation6], 128
    $region17: #{tpu_custom_call.1} parent=1 // pred_fallthru
      _
    %v40 = vld [vmem:[#allocation2] sm:$0xff]
    %v41 = vld [vmem:[#allocation5] sm:$0xff]
    %vm42 = vcmask 130048
    %v43 = vsel %vm42, %v40, -inf
    %44 = vmax.xlane.f32.xlu0 %v43
    %v45 = vpop.xlane.xlu0 %44
    %v46 = vsub.f32 %v40, %v45
    %v47 = vmul.f32 %v46, 1.442695
    %v48 = vpow.pop %v47
    %v49 = vsel %vm42, %v48, 0.0
    %50 = vadd.xlane.f32.xlu0 %v49
    %v51 = vpop.xlane.xlu0 %50
    %v52 = vlog2.pop %v51
    %v53 = vmul.f32 %v52, 0.6931472
    %v54 = vadd.f32 %v45, %v53
    %v55 = vsub.f32 %v54, %v40
    %v56 = vmul.f32 %v55, %v41
    %v57 = vsel %vm42, %v56, 0.0
    %58 = vadd.xlane.f32.xlu0 %v57
    %v59 = vpop.xlane.xlu0 %58
    %60 = vxpose.xlu0.b32.start [1/16] %v59, 128
    %61 = vxpose.xlu0.b32.cont [2/16] 0.0, 128
    %62 = vxpose.xlu0.b32.cont [3/16] 0.0, 128
    %63 = vxpose.xlu0.b32.cont [4/16] 0.0, 128
    %64 = vxpose.xlu0.b32.cont [5/16] 0.0, 128
    %65 = vxpose.xlu0.b32.cont [6/16] 0.0, 128
    %66 = vxpose.xlu0.b32.cont [7/16] 0.0, 128
    %67 = vxpose.xlu0.b32.cont [8/16] 0.0, 128
    %68 = vxpose.xlu0.b32.cont [9/16] 0.0, 128
    %69 = vxpose.xlu0.b32.cont [10/16] 0.0, 128
    %70 = vxpose.xlu0.b32.cont [11/16] 0.0, 128
    %71 = vxpose.xlu0.b32.cont [12/16] 0.0, 128
    %72 = vxpose.xlu0.b32.cont [13/16] 0.0, 128
    %73 = vxpose.xlu0.b32.cont [14/16] 0.0, 128
    %74 = vxpose.xlu0.b32.cont [15/16] 0.0, 128
    %75 = vxpose.xlu0.b32.end [16/16] 0.0, 128
    %v76 = vpop.trf.xlu0
    %v77 = vpop.trf.xlu0
    %v78 = vpop.trf.xlu0
    %v79 = vpop.trf.xlu0
    %v80 = vpop.trf.xlu0
    %v81 = vpop.trf.xlu0
    %v82 = vpop.trf.xlu0
    %v83 = vpop.trf.xlu0
    %v84 = vpop.trf.xlu0
    %v85 = vpop.trf.xlu0
    %v86 = vpop.trf.xlu0
    %v87 = vpop.trf.xlu0
    %v88 = vpop.trf.xlu0
    %v89 = vpop.trf.xlu0
    %v90 = vpop.trf.xlu0
    %v91 = vpop.trf.xlu0
    %vm92 = vcmask 57344
    %93 = vst.msk [vmem:[#allocation7] sm:$0x1] %vm92, %v76
    // Predicated region
    $region18: #{tpu_custom_call.1} parent=1 // pred_check
      _
    $region19: #{tpu_custom_call.1} parent=1 // pred_check_branch
      %95 = sbr.rel (0) target = $region21
    $region20: #{tpu_custom_call.1} parent=1 // pred_region
      %97 = vsyncadd [#allocation4], 0
      %s99 = sshll.u32 [#allocation7], 4
      %s100 = int_to_ptr.vmem [resolvable:$true] %s99
      %s101 = sshll.u32 %s2, 4
      %s102 = int_to_ptr.hbm [resolvable:$true] %s101
      %104 = dma.vmem_to_hbm [thread:$0]  %s100, 16, %s102, [#allocation4]
    $region21: #{tpu_custom_call.1} parent=1 // pred_fallthru
      _
    // Predicated region
    $region22: #{tpu_custom_call.1} parent=1 // pred_check
      _
    $region23: #{tpu_custom_call.1} parent=1 // pred_check_branch
      %106 = sbr.rel (0) target = $region25
    $region24: #{tpu_custom_call.1} parent=1 // pred_region
      %108 = dma.done [#allocation4], 16
    $region25: #{tpu_custom_call.1} parent=1 // pred_fallthru
      _
    %109 = vsyncpa [#allocation3], 1
    %110 = vsyncpa [#allocation6], 1
    %111 = vsyncpa [#allocation4], 1

</llo_original>
